<compile_context>
chip_gen: v7x
topology: tpu7x:2x2x1
jax: 0.10.0
libtpu: 0.0.40
codegen_flags: <defaults>
</compile_context>

<pallas_src>
import functools

import jax
import jax.numpy as jnp
from jax.experimental import pallas as pl
from jax.experimental.pallas import tpu as pltpu

K = 4
M = 4
MK = M * K
Pt = 10.0
_SCALE = float((Pt ** 2 / MK) ** 0.5)   # sqrt(Pt^2 / (M*K)), trace-time constant
_LANES = 128
_TB_MAX = 1024                          # max batch-tile rows (review: 512-1024)


def _round_up(x, m):
    return (x + m - 1) // m * m


def _cdiv(a, b):
    return -(-a // b)


def actor_kernel(s_ref, w_ref, b_ref, o_ref):
    # Collapsed single GEMM (bf16 operands -> native MXU path, f32 accumulation).
    x = jnp.dot(s_ref[...].astype(jnp.bfloat16), w_ref[...],
                preferred_element_type=jnp.float32) + b_ref[...]       # (TB, OUT_P) f32

    # Power-normalize the first M*K columns of every row (population variance,
    # matching np.mean/np.var in the PyTorch forward).  Single-pass mean/var,
    # variance clamped at 0 (f32 cancellation guard), rsqrt on the EUP.
    col = jax.lax.broadcasted_iota(jnp.int32, x.shape, dimension=1)
    mask = col < MK
    cnt = jnp.float32(MK)
    xm = jnp.where(mask, x, 0.0)
    s1 = jnp.sum(xm, axis=1, keepdims=True)
    s2 = jnp.sum(xm * xm, axis=1, keepdims=True)
    mean = s1 / cnt
    var = jnp.maximum(s2 / cnt - mean * mean, 0.0)
    inv = jax.lax.rsqrt(var) * jnp.float32(_SCALE)
    x = jnp.where(mask, (x - mean) * inv, x)

    o_ref[...] = jnp.tanh(x)


def prepare_params(params):
    """One-time preprocessing (hoisted out of the per-call path).

    Collapses the 4 activation-free Linear layers into a single (in, out) GEMM,
    pads the output dim to a 128-lane multiple, and casts the weight to bf16
    (the kernel keeps f32 accumulation).  Returns (w_pad_bf16, b_pad_f32, out_size).
    """
    w1, b1, w2, b2, w3, b3, w4, b4 = [a.astype(jnp.float32) for a in params]
    output_size = w4.shape[1]
    assert output_size >= MK, "power-normalization requires output_size >= M*K"

    w_eff = w1 @ w2 @ w3 @ w4                                    # (in, out)
    b_eff = ((b1 @ w2 + b2) @ w3 + b3) @ w4 + b4                 # (1, out)

    out_p = _round_up(output_size, _LANES)
    w_p = jnp.pad(w_eff, ((0, 0), (0, out_p - output_size))).astype(jnp.bfloat16)
    b_p = jnp.pad(b_eff, ((0, 0), (0, out_p - output_size)))     # bias stays f32
    return w_p, b_p, output_size


def _batch_tiling(batch):
    """Row-tile size / tile count / padded batch.  Tiles are multiples of 8,
    at most _TB_MAX rows, and the tile count is even and >= 2 so the
    'parallel' batch axis lands on both v7x TensorCores."""
    b8 = _round_up(max(batch, 1), 8)
    n = max(2, _cdiv(b8, _TB_MAX))
    n += n % 2
    tb = _round_up(_cdiv(b8, n), 8)
    return tb, n, tb * n


@functools.partial(jax.jit, static_argnames=("output_size",))
def actor_forward(s, w_p, b_p, *, output_size):
    """s: (input_size,) or (B, input_size) float32 -> matching-rank output."""
    squeeze = (s.ndim == 1)
    s2 = jnp.atleast_2d(s).astype(jnp.float32)
    B, input_size = s2.shape
    out_p = w_p.shape[1]

    tb, n_tiles, b_pad = _batch_tiling(B)
    sp = jnp.pad(s2, ((0, b_pad - B), (0, 0)))    # row padding only; no lane pad

    out = pl.pallas_call(
        actor_kernel,
        out_shape=jax.ShapeDtypeStruct((b_pad, out_p), jnp.float32),
        grid=(n_tiles,),
        in_specs=[
            # state rows: unpadded, full-extent last dim
            pl.BlockSpec((tb, input_size), lambda b: (b, 0)),
            # collapsed weight / bias: constant index_map -> DMA'd once and
            # VMEM-resident across all grid steps.
            # (pipeline_mode=pl.Buffered(1) would halve their residency; at
            #  these sizes the weight block is ~4 KiB, so it is not needed.)
            pl.BlockSpec((input_size, out_p), lambda b: (0, 0)),
            pl.BlockSpec((1, out_p), lambda b: (0, 0)),
        ],
        out_specs=pl.BlockSpec((tb, out_p), lambda b: (b, 0)),
        compiler_params=pltpu.CompilerParams(
            dimension_semantics=("parallel",),        # shard batch over v7x's 2 TCs
            vmem_limit_bytes=32 * 1024 * 1024,        # headroom above v5e's 16 MiB default
        ),
    )(sp, w_p, b_p)

    out = out[:B, :output_size]
    return out[0] if squeeze else out


def init_params(key, input_size, hidden_size, output_size):
    """Deterministic synthetic init (PyTorch Linear-style uniform bounds)."""
    def linear(k, fan_in, fan_out):
        k_w, k_b = jax.random.split(k)
        bound = 1.0 / (fan_in ** 0.5)
        # stored as (in, out) so the math is x @ W
        w = jax.random.uniform(k_w, (fan_in, fan_out), jnp.float32, -bound, bound)
        b = jax.random.uniform(k_b, (1, fan_out), jnp.float32, -bound, bound)
        return w, b

    k1, k2, k3, k4 = jax.random.split(key, 4)
    w1, b1 = linear(k1, input_size, hidden_size)
    w2, b2 = linear(k2, hidden_size, hidden_size)
    w3, b3 = linear(k3, hidden_size, hidden_size)
    w4, b4 = linear(k4, hidden_size, output_size)
    return (w1, b1, w2, b2, w3, b3, w4, b4)


def actor_reference(s, params):
    """Plain-JAX per-row mirror of the PyTorch forward (population variance)."""
    w1, b1, w2, b2, w3, b3, w4, b4 = params
    squeeze = (s.ndim == 1)
    x = jnp.atleast_2d(s).astype(jnp.float32)
    x = x @ w1 + b1
    x = x @ w2 + b2
    x = x @ w3 + b3
    x = x @ w4 + b4
    x1 = x[:, :MK]
    mean = jnp.mean(x1, axis=1, keepdims=True)
    var = jnp.var(x1, axis=1, keepdims=True)          # ddof=0, matches np.var
    x1 = (x1 - mean) / jnp.sqrt(var) * jnp.sqrt(Pt ** 2 / MK)
    x = x.at[:, :MK].set(x1)
    x = jnp.tanh(x)
    return x[0] if squeeze else x


if __name__ == "__main__":
    input_size, hidden_size, output_size = 16, 32, 32   # output_size >= M*K
    batch = 256

    key = jax.random.PRNGKey(0)
    k_params, k_state = jax.random.split(key)
    params = init_params(k_params, input_size, hidden_size, output_size)
    s_batch = jax.random.normal(k_state, (batch, input_size), jnp.float32)

    # one-time param preprocessing (collapse 4 layers -> 1 GEMM, pad, bf16)
    w_p, b_p, out_size = prepare_params(params)

    # batched path (main perf case)
    out = jax.block_until_ready(actor_forward(s_batch, w_p, b_p, output_size=out_size))
    ref = actor_reference(s_batch, params)
    assert out.shape == (batch, output_size)
    assert jnp.allclose(out, ref, atol=2e-2, rtol=2e-2), \
        float(jnp.max(jnp.abs(out - ref)))

    # original single-state (1-D) interface of the PyTorch module
    out1 = jax.block_until_ready(actor_forward(s_batch[0], w_p, b_p, output_size=out_size))
    ref1 = actor_reference(s_batch[0], params)
    assert out1.shape == (output_size,)
    assert jnp.allclose(out1, ref1, atol=2e-2, rtol=2e-2)

    print("KERNEL_OK")
</pallas_src>

<mosaic_0001>
module attributes {stable_mosaic.version = 11 : i64} {
  func.func @actor_kernel(%arg0: i32, %arg1: memref<128x16xf32, #tpu.memory_space<vmem>>, %arg2: memref<16x128xbf16, #tpu.memory_space<vmem>>, %arg3: memref<1x128xf32, #tpu.memory_space<vmem>>, %arg4: memref<128x128xf32, #tpu.memory_space<vmem>>) attributes {dimension_semantics = [#tpu.dimension_semantics<parallel>], iteration_bounds = array<i64: 2>, scalar_prefetch = 0 : i64, scratch_operands = 0 : i64, tpu.core_type = #tpu.core_type<tc>, window_params = [{transform_indices = @transform_0, window_bounds = array<i64: 128, 16>}, {pipeline_mode = #tpu.pipeline_mode<synchronous>, transform_indices = @transform_1, window_bounds = array<i64: 16, 128>}, {pipeline_mode = #tpu.pipeline_mode<synchronous>, transform_indices = @transform_2, window_bounds = array<i64: 1, 128>}, {transform_indices = @transform_3, window_bounds = array<i64: 128, 128>}]} {
    %c0 = arith.constant 0 : index
    %c0_0 = arith.constant 0 : index
    %0 = vector.load %arg1[%c0, %c0_0] : memref<128x16xf32, #tpu.memory_space<vmem>>, vector<128x16xf32>
    %1 = arith.truncf %0 : vector<128x16xf32> to vector<128x16xbf16>
    %c0_1 = arith.constant 0 : index
    %c0_2 = arith.constant 0 : index
    %2 = vector.load %arg2[%c0_1, %c0_2] : memref<16x128xbf16, #tpu.memory_space<vmem>>, vector<16x128xbf16>
    %cst = arith.constant dense<0.000000e+00> : vector<128x128xf32>
    %3 = tpu.matmul %1, %2, %cst {dimension_numbers = #tpu.dot_dimension_numbers<[1], [0], [0], [1], [0, 0, 1, 1], [], []>} : vector<128x16xbf16>, vector<16x128xbf16>, vector<128x128xf32> -> vector<128x128xf32>
    %c0_3 = arith.constant 0 : index
    %c0_4 = arith.constant 0 : index
    %4 = vector.load %arg3[%c0_3, %c0_4] : memref<1x128xf32, #tpu.memory_space<vmem>>, vector<1x128xf32>
    %5 = vector.broadcast %4 : vector<1x128xf32> to vector<128x128xf32>
    %6 = arith.addf %3, %5 : vector<128x128xf32>
    %7 = tpu.iota {dimensions = array<i32: 1>} : vector<128x128xi32>
    %c16_i32 = arith.constant 16 : i32
    %8 = vector.broadcast %c16_i32 : i32 to vector<128x128xi32>
    %9 = arith.cmpi slt, %7, %8 : vector<128x128xi32>
    %cst_5 = arith.constant 0.000000e+00 : f32
    %10 = vector.broadcast %cst_5 : f32 to vector<128x128xf32>
    %11 = arith.select %9, %6, %10 : vector<128x128xi1>, vector<128x128xf32>
    %cst_6 = arith.constant dense<0.000000e+00> : vector<128xf32>
    %12 = vector.multi_reduction <add>, %11, %cst_6 [1] : vector<128x128xf32> to vector<128xf32>
    %13 = vector.shape_cast %12 : vector<128xf32> to vector<128x1xf32>
    %14 = arith.mulf %11, %11 : vector<128x128xf32>
    %cst_7 = arith.constant dense<0.000000e+00> : vector<128xf32>
    %15 = vector.multi_reduction <add>, %14, %cst_7 [1] : vector<128x128xf32> to vector<128xf32>
    %16 = vector.shape_cast %15 : vector<128xf32> to vector<128x1xf32>
    %cst_8 = arith.constant 1.600000e+01 : f32
    %17 = vector.broadcast %cst_8 : f32 to vector<128x1xf32>
    %18 = arith.divf %13, %17 : vector<128x1xf32>
    %cst_9 = arith.constant 1.600000e+01 : f32
    %19 = vector.broadcast %cst_9 : f32 to vector<128x1xf32>
    %20 = arith.divf %16, %19 : vector<128x1xf32>
    %21 = arith.mulf %18, %18 : vector<128x1xf32>
    %22 = arith.subf %20, %21 : vector<128x1xf32>
    %cst_10 = arith.constant 0.000000e+00 : f32
    %23 = vector.broadcast %cst_10 : f32 to vector<128x1xf32>
    %24 = arith.maximumf %22, %23 : vector<128x1xf32>
    %25 = math.rsqrt %24 : vector<128x1xf32>
    %cst_11 = arith.constant 2.500000e+00 : f32
    %26 = vector.broadcast %cst_11 : f32 to vector<128x1xf32>
    %27 = arith.mulf %25, %26 : vector<128x1xf32>
    %28 = vector.broadcast %18 : vector<128x1xf32> to vector<128x128xf32>
    %29 = arith.subf %6, %28 : vector<128x128xf32>
    %30 = vector.broadcast %27 : vector<128x1xf32> to vector<128x128xf32>
    %31 = arith.mulf %29, %30 : vector<128x128xf32>
    %32 = arith.select %9, %31, %6 : vector<128x128xi1>, vector<128x128xf32>
    %33 = math.tanh %32 : vector<128x128xf32>
    %c0_12 = arith.constant 0 : index
    %c0_13 = arith.constant 0 : index
    %34 = vector.load %arg4[%c0_12, %c0_13] : memref<128x128xf32, #tpu.memory_space<vmem>>, vector<128x128xf32>
    tpu.vector_store %arg4[%c0_12, %c0_13], %33 {strides = array<i32>} : memref<128x128xf32, #tpu.memory_space<vmem>>, vector<128x128xf32>,
    return
  }
  func.func @transform_0(%arg0: i32) -> (i32, i32) {
    %c0_i32 = arith.constant 0 : i32
    %c0_i32_0 = arith.constant 0 : i32
    return %arg0, %c0_i32 : i32, i32
  }
  func.func @transform_1(%arg0: i32) -> (i32, i32) {
    %c0_i32 = arith.constant 0 : i32
    %c0_i32_0 = arith.constant 0 : i32
    %c0_i32_1 = arith.constant 0 : i32
    return %c0_i32, %c0_i32_0 : i32, i32
  }
  func.func @transform_2(%arg0: i32) -> (i32, i32) {
    %c0_i32 = arith.constant 0 : i32
    %c0_i32_0 = arith.constant 0 : i32
    %c0_i32_1 = arith.constant 0 : i32
    return %c0_i32, %c0_i32_0 : i32, i32
  }
  func.func @transform_3(%arg0: i32) -> (i32, i32) {
    %c0_i32 = arith.constant 0 : i32
    %c0_i32_0 = arith.constant 0 : i32
    return %arg0, %c0_i32 : i32, i32
  }
}

</mosaic_0001>

<llo_original>
// kernel: actor_forward.1
$region0: #{actor_forward.1}
  #allocation0 [shape = 'u32[]', space=smem, size = 0x4, offset = 0x4, fixed_abs, tag = 'smem constant byte address 0x4 - core index']
  #allocation1 [shape = 'u32[144,128]{1,0:T(1,128)}', space=vmem, size = 0x12000, scoped, tag = 'internal scratch']
  %s0 = inlined_call_operand.vmem [shape: f32[256,16], index: 0, kind: input, shape index: {}]
  %s1 = inlined_call_operand.vmem [shape: bf16[16,128], index: 1, kind: input, shape index: {}]
  %s2 = inlined_call_operand.vmem [shape: f32[1,128], index: 2, kind: input, shape index: {}]
  %s3 = inlined_call_operand.vmem [shape: f32[256,128], index: 3, kind: output, shape index: {}]
  %s4 = sld [smem:[#allocation0]]
  $region45: #{actor_forward.1} parent=0
    _
  %s6 = ssub.s32 1, %s4
  %s7 = scalar_select 0, %s6, %s4
  loop: start=0, step=1, limit=4
  $region2: #{actor_forward.1} parent=0 // loop_pre_header
    _
  $region3: #{actor_forward.1} parent=0 // loop_header
    %s9 = sphi 0, %s13
    %p10 = scmp.ge.s32.totalorder %s9, 4
    %s19 = sphi 0, %s21
    %s22 = sphi 0, %s19
    %s23 = sphi 0, %s22
    %s39 = sphi 0, %s23
    %s43 = sphi 0, %s43
    %s45 = sphi 0, %s43
    %s46 = sphi 0, %s45
    %s60 = sphi 0, %s46
    %s64 = sphi 0, %s64
    %s66 = sphi 0, %s64
    %s67 = sphi 0, %s66
    %s81 = sphi 0, %s67
    %s87 = sphi 0, %s89
    %s90 = sphi 0, %s87
    %s91 = sphi 0, %s90
    %s107 = sphi 0, %s91
  $region4: #{actor_forward.1} parent=0 // loop_header_branch
    %12 = sbr.rel (%p10) target = $region8
  $region5: #{actor_forward.1} parent=0 // loop_body
    %s14 = ssub.s32 %s9, 1
    %s15 = ssub.s32 %s9, 2
    %s16 = sadd.s32 %s9, 1
    %s17 = ssub.s32 %s9, %s16
    %p18 = scmp.eq.s32.totalorder %s17, 0
    %s20 = sadd.s32 %s19, 1
    %s21 = scalar_select %p18, %s19, %s20
    %p24 = pneg %p18
    %p25 = scmp.eq.s32.totalorder %s9, 1
    %p26 = por %p24, %p25
    %p27 = scmp.ne.s32.totalorder %s19, %s22
    %p28 = scmp.eq.s32.totalorder %s9, 0
    %p29 = por %p27, %p28
    %p30 = scmp.ne.s32.totalorder %s19, %s22
    %p31 = scmp.eq.s32.totalorder %s14, 1
    %p32 = por %p30, %p31
    %p33 = scmp.ne.s32.totalorder %s22, %s23
    %p34 = scmp.eq.s32.totalorder %s14, 0
    %p35 = por %p33, %p34
    %p36 = scmp.ne.s32.totalorder %s22, %s23
    %p37 = scmp.eq.s32.totalorder %s15, 1
    %p38 = por %p36, %p37
    %p40 = scmp.ne.s32.totalorder %s23, %s39
    %p41 = scmp.eq.s32.totalorder %s15, 0
    %p42 = por %p40, %p41
    %s44 = sadd.s32 %s43, 1
    %p47 = scmp.eq.s32.totalorder %s9, 1
    %p48 = scmp.ne.s32.totalorder %s43, %s45
    %p49 = scmp.eq.s32.totalorder %s9, 0
    %p50 = por %p48, %p49
    %p51 = scmp.ne.s32.totalorder %s43, %s45
    %p52 = scmp.eq.s32.totalorder %s14, 1
    %p53 = por %p51, %p52
    %p54 = scmp.ne.s32.totalorder %s45, %s46
    %p55 = scmp.eq.s32.totalorder %s14, 0
    %p56 = por %p54, %p55
    %p57 = scmp.ne.s32.totalorder %s45, %s46
    %p58 = scmp.eq.s32.totalorder %s15, 1
    %p59 = por %p57, %p58
    %p61 = scmp.ne.s32.totalorder %s46, %s60
    %p62 = scmp.eq.s32.totalorder %s15, 0
    %p63 = por %p61, %p62
    %s65 = sadd.s32 %s64, 1
    %p68 = scmp.eq.s32.totalorder %s9, 1
    %p69 = scmp.ne.s32.totalorder %s64, %s66
    %p70 = scmp.eq.s32.totalorder %s9, 0
    %p71 = por %p69, %p70
    %p72 = scmp.ne.s32.totalorder %s64, %s66
    %p73 = scmp.eq.s32.totalorder %s14, 1
    %p74 = por %p72, %p73
    %p75 = scmp.ne.s32.totalorder %s66, %s67
    %p76 = scmp.eq.s32.totalorder %s14, 0
    %p77 = por %p75, %p76
    %p78 = scmp.ne.s32.totalorder %s66, %s67
    %p79 = scmp.eq.s32.totalorder %s15, 1
    %p80 = por %p78, %p79
    %p82 = scmp.ne.s32.totalorder %s67, %s81
    %p83 = scmp.eq.s32.totalorder %s15, 0
    %p84 = por %p82, %p83
    %s85 = ssub.s32 %s9, %s16
    %p86 = scmp.eq.s32.totalorder %s85, 0
    %s88 = sadd.s32 %s87, 1
    %s89 = scalar_select %p86, %s87, %s88
    %p92 = pneg %p86
    %p93 = scmp.eq.s32.totalorder %s9, 1
    %p94 = por %p92, %p93
    %p95 = scmp.ne.s32.totalorder %s87, %s90
    %p96 = scmp.eq.s32.totalorder %s9, 0
    %p97 = por %p95, %p96
    %p98 = scmp.ne.s32.totalorder %s87, %s90
    %p99 = scmp.eq.s32.totalorder %s14, 1
    %p100 = por %p98, %p99
    %p101 = scmp.ne.s32.totalorder %s90, %s91
    %p102 = scmp.eq.s32.totalorder %s14, 0
    %p103 = por %p101, %p102
    %p104 = scmp.ne.s32.totalorder %s90, %s91
    %p105 = scmp.eq.s32.totalorder %s15, 1
    %p106 = por %p104, %p105
    %p108 = scmp.ne.s32.totalorder %s91, %s107
    %p109 = scmp.eq.s32.totalorder %s15, 0
    %p110 = por %p108, %p109
    %p111 = scmp.le.s32.totalorder 1, %s9
    %p112 = scmp.lt.s32.totalorder %s9, 3
    %p113 = pnand %p111, %p112
    %p114 = pneg %p113
    // Predicated region
    $region9: #{actor_forward.1} parent=5 // pred_check
      _
    $region10: #{actor_forward.1} parent=5 // pred_check_branch
      %116 = sbr.rel (%p113) target = $region12
    $region11: #{actor_forward.1} parent=5 // pred_region
      %s117 = ssub.s32 %s9, 1
      // Predicated region
      $region13: #{actor_forward.1} parent=11 // pred_check
        %p118 = pneg %p56
      $region14: #{actor_forward.1} parent=11 // pred_check_branch
        %120 = sbr.rel (%p118) target = $region16
      $region15: #{actor_forward.1} parent=11 // pred_region
        _
      $region16: #{actor_forward.1} parent=11 // pred_fallthru
        _
      // Predicated region
      $region17: #{actor_forward.1} parent=11 // pred_check
        %p121 = pneg %p77
      $region18: #{actor_forward.1} parent=11 // pred_check_branch
        %123 = sbr.rel (%p121) target = $region20
      $region19: #{actor_forward.1} parent=11 // pred_region
        _
      $region20: #{actor_forward.1} parent=11 // pred_fallthru
        _
    $region12: #{actor_forward.1} parent=5 // pred_fallthru
      _
    %p124 = scmp.lt.s32.totalorder %s9, 2
    // Predicated region
    $region21: #{actor_forward.1} parent=5 // pred_check
      %p125 = pneg %p124
    $region22: #{actor_forward.1} parent=5 // pred_check_branch
      %127 = sbr.rel (%p125) target = $region24
    $region23: #{actor_forward.1} parent=5 // pred_region
      // Predicated region
      $region25: #{actor_forward.1} parent=23 // pred_check
        %p128 = pneg %p29
      $region26: #{actor_forward.1} parent=23 // pred_check_branch
        %130 = sbr.rel (%p128) target = $region28
      $region27: #{actor_forward.1} parent=23 // pred_region
        %s131 = smul.u32 16, %s9
        %p132 = scmp.lt.s32.totalorder %s131, 31
        %s133 = scalar_select %p132, %s131, 31
        %s134 = smul.addr %s133, 8
        %s135 = scalar_lea.vmem %s0, %s134
        %s136 = smul.u32 16, %s9
      $region28: #{actor_forward.1} parent=23 // pred_fallthru
        _
    $region24: #{actor_forward.1} parent=5 // pred_fallthru
      _
    %p137 = scmp.le.s32.totalorder 1, %s9
    %p138 = scmp.lt.s32.totalorder %s9, 3
    %p139 = pnand %p137, %p138
    %p140 = pneg %p139
    // Predicated region
    $region29: #{actor_forward.1} parent=5 // pred_check
      _
    $region30: #{actor_forward.1} parent=5 // pred_check_branch
      %142 = sbr.rel (%p139) target = $region32
    $region31: #{actor_forward.1} parent=5 // pred_region
      %s143 = ssub.s32 %s9, 1
      %s144 = smul.u32 16, %s14
      %p145 = scmp.lt.s32.totalorder %s144, 31
      %s146 = scalar_select %p145, %s144, 31
      %s147 = smul.addr %s146, 8
      %s148 = scalar_lea.vmem %s0, %s147
      %p149 = pneg %p35
      %p150 = pneg %p32
      %p151 = pneg %p56
      %p152 = pneg %p53
      %p153 = pneg %p77
      %p154 = pneg %p74
      %p155 = pneg %p103
      %p156 = pneg %p100
      %s157 = smul.u32 16, %s14
      %p158 = scmp.lt.s32.totalorder %s157, 31
      %s159 = scalar_select %p158, %s157, 31
      %s160 = smul.addr %s159, 8
      %s161 = scalar_lea.vmem %s3, %s160
      %s162 = smul.u32 16, %s14
      %p163 = scmp.lt.s32.totalorder %s162, 31
      %s164 = scalar_select %p163, %s162, 31
      %s165 = smul.addr %s164, 8
      %s166 = scalar_lea.vmem %s0, %s165
      %s167 = smul.u32 16, %s14
      %s168 = smul.u32 16, %s14
      %p169 = scmp.lt.s32.totalorder %s168, 31
      %s170 = scalar_select %p169, %s168, 31
      %s171 = smul.addr %s170, 8
      %s172 = scalar_lea.vmem %s3, %s171
      %s173 = smul.u32 16, %s14
      %v175 = vld [vmem:[%s166] sm:$0xff]
      %v176 = vld [vmem:[%s166 + $0x8] sm:$0xff]
      %v177 = vld [vmem:[%s166 + $0x10] sm:$0xff]
      %v178 = vld [vmem:[%s166 + $0x18] sm:$0xff]
      %v179 = vld [vmem:[%s166 + $0x20] sm:$0xff]
      %v180 = vld [vmem:[%s166 + $0x28] sm:$0xff]
      %v181 = vld [vmem:[%s166 + $0x30] sm:$0xff]
      %v182 = vld [vmem:[%s166 + $0x38] sm:$0xff]
      %v183 = vld [vmem:[%s166 + $0x40] sm:$0xff]
      %v184 = vld [vmem:[%s166 + $0x48] sm:$0xff]
      %v185 = vld [vmem:[%s166 + $0x50] sm:$0xff]
      %v186 = vld [vmem:[%s166 + $0x58] sm:$0xff]
      %v187 = vld [vmem:[%s166 + $0x60] sm:$0xff]
      %v188 = vld [vmem:[%s166 + $0x68] sm:$0xff]
      %v189 = vld [vmem:[%s166 + $0x70] sm:$0xff]
      %v190 = vld [vmem:[%s166 + $0x78] sm:$0xff]
      %v191 = vpack.c.bf16 %v176, %v175
      %v192 = vpack.c.bf16 %v178, %v177
      %v193 = vpack.c.bf16 %v180, %v179
      %v194 = vpack.c.bf16 %v182, %v181
      %v195 = vpack.c.bf16 %v184, %v183
      %v196 = vpack.c.bf16 %v186, %v185
      %v197 = vpack.c.bf16 %v188, %v187
      %v198 = vpack.c.bf16 %v190, %v189
      %v199 = vld [vmem:[%s1] sm:$0xf]
      %v200 = vld [vmem:[%s1 + $0x4] sm:$0xf]
      %v201 = vld [vmem:[%s2] sm:$0x1]
      %v203 = vlaneseq
      %v204 = vshrl.u32 %v203, 7
      %v205 = vsub.s32 0, %v204
      %v206 = vrot.slane %v201, %v205
      %v210 = vunpack.c.l.b16 %v199
      %v211 = vunpack.c.l.b16 %v200
      %v212 = vpack.c.b16 %v211, %v210
      %vm214 = vcmask 130048
      %v216 = vsel %vm214, %v191, 0
      %v219 = vsel %vm214, %v192, 0
      %v222 = vsel %vm214, %v193, 0
      %v225 = vsel %vm214, %v194, 0
      %v228 = vsel %vm214, %v195, 0
      %v231 = vsel %vm214, %v196, 0
      %v234 = vsel %vm214, %v197, 0
      %v237 = vsel %vm214, %v198, 0
      %239 = vmatprep.subr.bf16.mxu0 0
      %240 = vmatpush1.bf16.msra.mxu0 %v212
      %241 = vmatprep.subr.bf16.mxu0 0
      %242 = vmatpush1.bf16.msra.mxu0 0
      %243 = vmatprep.subr.bf16.mxu0 0
      %244 = vmatpush1.bf16.msra.mxu0 0
      %245 = vmatprep.subr.bf16.mxu0 0
      %246 = vmatpush1.bf16.msra.mxu0 0
      %247 = vmatprep.subr.bf16.mxu0 0
      %248 = vmatpush1.bf16.msra.mxu0 0
      %249 = vmatprep.subr.bf16.mxu0 0
      %250 = vmatpush1.bf16.msra.mxu0 0
      %251 = vmatprep.subr.bf16.mxu0 0
      %252 = vmatpush1.bf16.msra.mxu0 0
      %253 = vmatprep.subr.bf16.mxu0 0
      %254 = vmatpush1.bf16.msra.mxu0 0
      %255 = vmatprep.subr.bf16.mxu0 0
      %256 = vmatpush1.bf16.msra.mxu0 0
      %257 = vmatprep.subr.bf16.mxu0 0
      %258 = vmatpush1.bf16.msra.mxu0 0
      %259 = vmatprep.subr.bf16.mxu0 0
      %260 = vmatpush1.bf16.msra.mxu0 0
      %261 = vmatprep.subr.bf16.mxu0 0
      %262 = vmatpush1.bf16.msra.mxu0 0
      %263 = vmatprep.subr.bf16.mxu0 0
      %264 = vmatpush1.bf16.msra.mxu0 0
      %265 = vmatprep.subr.bf16.mxu0 0
      %266 = vmatpush1.bf16.msra.mxu0 0
      %267 = vmatprep.subr.bf16.mxu0 0
      %268 = vmatpush1.bf16.msra.mxu0 0
      %269 = vmatprep.subr.bf16.mxu0 0
      %270 = vmatpush1.bf16.msra.mxu0 0
      %271 = vmatprep.mubr.bf16.mxu0 0
      %272 = vmatmul.mubr.bf16.gmra.mrb[0].mxu0 %v216
      %v273 = vpop.f32.mrb[0].mxu0
      %v274 = vadd.f32 %v206, %v273
      %v275 = vpop.f32.mrb[0].mxu0
      %v276 = vpop.f32.mrb[0].mxu0
      %v277 = vadd.f32 %v206, %v276
      %v278 = vpop.f32.mrb[0].mxu0
      %279 = vmatprep.mubr.bf16.mxu0 0
      %280 = vmatmul.mubr.bf16.gmra.mrb[0].mxu0 %v219
      %v281 = vpop.f32.mrb[0].mxu0
      %v282 = vadd.f32 %v206, %v281
      %v283 = vpop.f32.mrb[0].mxu0
      %v284 = vpop.f32.mrb[0].mxu0
      %v285 = vadd.f32 %v206, %v284
      %v286 = vpop.f32.mrb[0].mxu0
      %287 = vmatprep.mubr.bf16.mxu0 0
      %288 = vmatmul.mubr.bf16.gmra.mrb[0].mxu0 %v222
      %v289 = vpop.f32.mrb[0].mxu0
      %v290 = vadd.f32 %v206, %v289
      %v291 = vpop.f32.mrb[0].mxu0
      %v292 = vpop.f32.mrb[0].mxu0
      %v293 = vadd.f32 %v206, %v292
      %v294 = vpop.f32.mrb[0].mxu0
      %295 = vmatprep.mubr.bf16.mxu0 0
      %296 = vmatmul.mubr.bf16.gmra.mrb[0].mxu0 %v225
      %v297 = vpop.f32.mrb[0].mxu0
      %v298 = vadd.f32 %v206, %v297
      %v299 = vpop.f32.mrb[0].mxu0
      %v300 = vpop.f32.mrb[0].mxu0
      %v301 = vadd.f32 %v206, %v300
      %v302 = vpop.f32.mrb[0].mxu0
      %303 = vmatprep.mubr.bf16.mxu0 0
      %304 = vmatmul.mubr.bf16.gmra.mrb[0].mxu0 %v228
      %v305 = vpop.f32.mrb[0].mxu0
      %v306 = vadd.f32 %v206, %v305
      %v307 = vpop.f32.mrb[0].mxu0
      %v308 = vpop.f32.mrb[0].mxu0
      %v309 = vadd.f32 %v206, %v308
      %v310 = vpop.f32.mrb[0].mxu0
      %311 = vmatprep.mubr.bf16.mxu0 0
      %312 = vmatmul.mubr.bf16.gmra.mrb[0].mxu0 %v231
      %v313 = vpop.f32.mrb[0].mxu0
      %v314 = vadd.f32 %v206, %v313
      %v315 = vpop.f32.mrb[0].mxu0
      %v316 = vpop.f32.mrb[0].mxu0
      %v317 = vadd.f32 %v206, %v316
      %v318 = vpop.f32.mrb[0].mxu0
      %319 = vmatprep.mubr.bf16.mxu0 0
      %320 = vmatmul.mubr.bf16.gmra.mrb[0].mxu0 %v234
      %v321 = vpop.f32.mrb[0].mxu0
      %v322 = vadd.f32 %v206, %v321
      %v323 = vpop.f32.mrb[0].mxu0
      %v324 = vpop.f32.mrb[0].mxu0
      %v325 = vadd.f32 %v206, %v324
      %v326 = vpop.f32.mrb[0].mxu0
      %327 = vmatprep.mubr.bf16.mxu0 0
      %328 = vmatmul.mubr.bf16.gmra.mrb[0].mxu0 %v237
      %v329 = vpop.f32.mrb[0].mxu0
      %v330 = vadd.f32 %v206, %v329
      %v331 = vpop.f32.mrb[0].mxu0
      %v332 = vpop.f32.mrb[0].mxu0
      %v333 = vadd.f32 %v206, %v332
      %v334 = vpop.f32.mrb[0].mxu0
      %335 = vdwg.mxu0
      %v336 = vlaneseq
      %v337 = vand.u32 %v336, 127
      %vm338 = vcmp.lt.s32.totalorder %v337, 16
      %v339 = vsel %vm338, %v274, 0.0
      %v340 = vsel %vm338, %v277, 0.0
      %v341 = vsel %vm338, %v282, 0.0
      %v342 = vsel %vm338, %v285, 0.0
      %v343 = vsel %vm338, %v290, 0.0
      %v344 = vsel %vm338, %v293, 0.0
      %v345 = vsel %vm338, %v298, 0.0
      %v346 = vsel %vm338, %v301, 0.0
      %v347 = vsel %vm338, %v306, 0.0
      %v348 = vsel %vm338, %v309, 0.0
      %v349 = vsel %vm338, %v314, 0.0
      %v350 = vsel %vm338, %v317, 0.0
      %v351 = vsel %vm338, %v322, 0.0
      %v352 = vsel %vm338, %v325, 0.0
      %v353 = vsel %vm338, %v330, 0.0
      %v354 = vsel %vm338, %v333, 0.0
      %355 = vadd.xlane.f32.xlu0 %v339
      %v356 = vpop.xlane.xlu0 %355
      %357 = vadd.xlane.f32.xlu0 %v340
      %v358 = vpop.xlane.xlu0 %357
      %359 = vadd.xlane.f32.xlu0 %v341
      %v360 = vpop.xlane.xlu0 %359
      %361 = vadd.xlane.f32.xlu0 %v342
      %v362 = vpop.xlane.xlu0 %361
      %363 = vadd.xlane.f32.xlu0 %v343
      %v364 = vpop.xlane.xlu0 %363
      %365 = vadd.xlane.f32.xlu0 %v344
      %v366 = vpop.xlane.xlu0 %365
      %367 = vadd.xlane.f32.xlu0 %v345
      %v368 = vpop.xlane.xlu0 %367
      %369 = vadd.xlane.f32.xlu0 %v346
      %v370 = vpop.xlane.xlu0 %369
      %371 = vadd.xlane.f32.xlu0 %v347
      %v372 = vpop.xlane.xlu0 %371
      %373 = vadd.xlane.f32.xlu0 %v348
      %v374 = vpop.xlane.xlu0 %373
      %375 = vadd.xlane.f32.xlu0 %v349
      %v376 = vpop.xlane.xlu0 %375
      %377 = vadd.xlane.f32.xlu0 %v350
      %v378 = vpop.xlane.xlu0 %377
      %379 = vadd.xlane.f32.xlu0 %v351
      %v380 = vpop.xlane.xlu0 %379
      %381 = vadd.xlane.f32.xlu0 %v352
      %v382 = vpop.xlane.xlu0 %381
      %383 = vadd.xlane.f32.xlu0 %v353
      %v384 = vpop.xlane.xlu0 %383
      %385 = vadd.xlane.f32.xlu0 %v354
      %v386 = vpop.xlane.xlu0 %385
      %v387 = vmul.f32 %v339, %v339
      %v388 = vmul.f32 %v340, %v340
      %v389 = vmul.f32 %v341, %v341
      %v390 = vmul.f32 %v342, %v342
      %v391 = vmul.f32 %v343, %v343
      %v392 = vmul.f32 %v344, %v344
      %v393 = vmul.f32 %v345, %v345
      %v394 = vmul.f32 %v346, %v346
      %v395 = vmul.f32 %v347, %v347
      %v396 = vmul.f32 %v348, %v348
      %v397 = vmul.f32 %v349, %v349
      %v398 = vmul.f32 %v350, %v350
      %v399 = vmul.f32 %v351, %v351
      %v400 = vmul.f32 %v352, %v352
      %v401 = vmul.f32 %v353, %v353
      %v402 = vmul.f32 %v354, %v354
      %403 = vadd.xlane.f32.xlu0 %v387
      %v404 = vpop.xlane.xlu0 %403
      %405 = vadd.xlane.f32.xlu0 %v388
      %v406 = vpop.xlane.xlu0 %405
      %407 = vadd.xlane.f32.xlu0 %v389
      %v408 = vpop.xlane.xlu0 %407
      %409 = vadd.xlane.f32.xlu0 %v390
      %v410 = vpop.xlane.xlu0 %409
      %411 = vadd.xlane.f32.xlu0 %v391
      %v412 = vpop.xlane.xlu0 %411
      %413 = vadd.xlane.f32.xlu0 %v392
      %v414 = vpop.xlane.xlu0 %413
      %415 = vadd.xlane.f32.xlu0 %v393
      %v416 = vpop.xlane.xlu0 %415
      %417 = vadd.xlane.f32.xlu0 %v394
      %v418 = vpop.xlane.xlu0 %417
      %419 = vadd.xlane.f32.xlu0 %v395
      %v420 = vpop.xlane.xlu0 %419
      %421 = vadd.xlane.f32.xlu0 %v396
      %v422 = vpop.xlane.xlu0 %421
      %423 = vadd.xlane.f32.xlu0 %v397
      %v424 = vpop.xlane.xlu0 %423
      %425 = vadd.xlane.f32.xlu0 %v398
      %v426 = vpop.xlane.xlu0 %425
      %427 = vadd.xlane.f32.xlu0 %v399
      %v428 = vpop.xlane.xlu0 %427
      %429 = vadd.xlane.f32.xlu0 %v400
      %v430 = vpop.xlane.xlu0 %429
      %431 = vadd.xlane.f32.xlu0 %v401
      %v432 = vpop.xlane.xlu0 %431
      %433 = vadd.xlane.f32.xlu0 %v402
      %v434 = vpop.xlane.xlu0 %433
      %v435 = vrcp.pop 16.0
      %v436 = vmul.f32 %v356, %v435
      %v437 = vmul.f32 %v358, %v435
      %v438 = vmul.f32 %v360, %v435
      %v439 = vmul.f32 %v362, %v435
      %v440 = vmul.f32 %v364, %v435
      %v441 = vmul.f32 %v366, %v435
      %v442 = vmul.f32 %v368, %v435
      %v443 = vmul.f32 %v370, %v435
      %v444 = vmul.f32 %v372, %v435
      %v445 = vmul.f32 %v374, %v435
      %v446 = vmul.f32 %v376, %v435
      %v447 = vmul.f32 %v378, %v435
      %v448 = vmul.f32 %v380, %v435
      %v449 = vmul.f32 %v382, %v435
      %v450 = vmul.f32 %v384, %v435
      %v451 = vmul.f32 %v386, %v435
      %v452 = vmul.f32 %v404, %v435
      %v453 = vmul.f32 %v406, %v435
      %v454 = vmul.f32 %v408, %v435
      %v455 = vmul.f32 %v410, %v435
      %v456 = vmul.f32 %v412, %v435
      %v457 = vmul.f32 %v414, %v435
      %v458 = vmul.f32 %v416, %v435
      %v459 = vmul.f32 %v418, %v435
      %v460 = vmul.f32 %v420, %v435
      %v461 = vmul.f32 %v422, %v435
      %v462 = vmul.f32 %v424, %v435
      %v463 = vmul.f32 %v426, %v435
      %v464 = vmul.f32 %v428, %v435
      %v465 = vmul.f32 %v430, %v435
      %v466 = vmul.f32 %v432, %v435
      %v467 = vmul.f32 %v434, %v435
      %v468 = vmul.f32 %v436, %v436
      %v469 = vmul.f32 %v437, %v437
      %v470 = vmul.f32 %v438, %v438
      %v471 = vmul.f32 %v439, %v439
      %v472 = vmul.f32 %v440, %v440
      %v473 = vmul.f32 %v441, %v441
      %v474 = vmul.f32 %v442, %v442
      %v475 = vmul.f32 %v443, %v443
      %v476 = vmul.f32 %v444, %v444
      %v477 = vmul.f32 %v445, %v445
      %v478 = vmul.f32 %v446, %v446
      %v479 = vmul.f32 %v447, %v447
      %v480 = vmul.f32 %v448, %v448
      %v481 = vmul.f32 %v449, %v449
      %v482 = vmul.f32 %v450, %v450
      %v483 = vmul.f32 %v451, %v451
      %v484 = vsub.f32 %v452, %v468
      %v485 = vsub.f32 %v453, %v469
      %v486 = vsub.f32 %v454, %v470
      %v487 = vsub.f32 %v455, %v471
      %v488 = vsub.f32 %v456, %v472
      %v489 = vsub.f32 %v457, %v473
      %v490 = vsub.f32 %v458, %v474
      %v491 = vsub.f32 %v459, %v475
      %v492 = vsub.f32 %v460, %v476
      %v493 = vsub.f32 %v461, %v477
      %v494 = vsub.f32 %v462, %v478
      %v495 = vsub.f32 %v463, %v479
      %v496 = vsub.f32 %v464, %v480
      %v497 = vsub.f32 %v465, %v481
      %v498 = vsub.f32 %v466, %v482
      %v499 = vsub.f32 %v467, %v483
      %v500 = vmax.f32 %v484, 0.0
      %v501 = vmax.f32 %v485, 0.0
      %v502 = vmax.f32 %v486, 0.0
      %v503 = vmax.f32 %v487, 0.0
      %v504 = vmax.f32 %v488, 0.0
      %v505 = vmax.f32 %v489, 0.0
      %v506 = vmax.f32 %v490, 0.0
      %v507 = vmax.f32 %v491, 0.0
      %v508 = vmax.f32 %v492, 0.0
      %v509 = vmax.f32 %v493, 0.0
      %v510 = vmax.f32 %v494, 0.0
      %v511 = vmax.f32 %v495, 0.0
      %v512 = vmax.f32 %v496, 0.0
      %v513 = vmax.f32 %v497, 0.0
      %v514 = vmax.f32 %v498, 0.0
      %v515 = vmax.f32 %v499, 0.0
      %v516 = vrsqrt.pop %v500
      %v517 = vrsqrt.pop %v501
      %v518 = vrsqrt.pop %v502
      %v519 = vrsqrt.pop %v503
      %v520 = vrsqrt.pop %v504
      %v521 = vrsqrt.pop %v505
      %v522 = vrsqrt.pop %v506
      %v523 = vrsqrt.pop %v507
      %v524 = vrsqrt.pop %v508
      %v525 = vrsqrt.pop %v509
      %v526 = vrsqrt.pop %v510
      %v527 = vrsqrt.pop %v511
      %v528 = vrsqrt.pop %v512
      %v529 = vrsqrt.pop %v513
      %v530 = vrsqrt.pop %v514
      %v531 = vrsqrt.pop %v515
      %v532 = vmul.f32 %v516, 2.5
      %v533 = vmul.f32 %v517, 2.5
      %v534 = vmul.f32 %v518, 2.5
      %v535 = vmul.f32 %v519, 2.5
      %v536 = vmul.f32 %v520, 2.5
      %v537 = vmul.f32 %v521, 2.5
      %v538 = vmul.f32 %v522, 2.5
      %v539 = vmul.f32 %v523, 2.5
      %v540 = vmul.f32 %v524, 2.5
      %v541 = vmul.f32 %v525, 2.5
      %v542 = vmul.f32 %v526, 2.5
      %v543 = vmul.f32 %v527, 2.5
      %v544 = vmul.f32 %v528, 2.5
      %v545 = vmul.f32 %v529, 2.5
      %v546 = vmul.f32 %v530, 2.5
      %v547 = vmul.f32 %v531, 2.5
      %v548 = vsub.f32 %v274, %v436
      %v549 = vsub.f32 %v277, %v437
      %v550 = vsub.f32 %v282, %v438
      %v551 = vsub.f32 %v285, %v439
      %v552 = vsub.f32 %v290, %v440
      %v553 = vsub.f32 %v293, %v441
      %v554 = vsub.f32 %v298, %v442
      %v555 = vsub.f32 %v301, %v443
      %v556 = vsub.f32 %v306, %v444
      %v557 = vsub.f32 %v309, %v445
      %v558 = vsub.f32 %v314, %v446
      %v559 = vsub.f32 %v317, %v447
      %v560 = vsub.f32 %v322, %v448
      %v561 = vsub.f32 %v325, %v449
      %v562 = vsub.f32 %v330, %v450
      %v563 = vsub.f32 %v333, %v451
      %v564 = vmul.f32 %v548, %v532
      %v565 = vmul.f32 %v549, %v533
      %v566 = vmul.f32 %v550, %v534
      %v567 = vmul.f32 %v551, %v535
      %v568 = vmul.f32 %v552, %v536
      %v569 = vmul.f32 %v553, %v537
      %v570 = vmul.f32 %v554, %v538
      %v571 = vmul.f32 %v555, %v539
      %v572 = vmul.f32 %v556, %v540
      %v573 = vmul.f32 %v557, %v541
      %v574 = vmul.f32 %v558, %v542
      %v575 = vmul.f32 %v559, %v543
      %v576 = vmul.f32 %v560, %v544
      %v577 = vmul.f32 %v561, %v545
      %v578 = vmul.f32 %v562, %v546
      %v579 = vmul.f32 %v563, %v547
      %v580 = vsel %vm338, %v564, %v274
      %v581 = vsel %vm338, %v565, %v277
      %v582 = vsel %vm338, %v566, %v282
      %v583 = vsel %vm338, %v567, %v285
      %v584 = vsel %vm338, %v568, %v290
      %v585 = vsel %vm338, %v569, %v293
      %v586 = vsel %vm338, %v570, %v298
      %v587 = vsel %vm338, %v571, %v301
      %v588 = vsel %vm338, %v572, %v306
      %v589 = vsel %vm338, %v573, %v309
      %v590 = vsel %vm338, %v574, %v314
      %v591 = vsel %vm338, %v575, %v317
      %v592 = vsel %vm338, %v576, %v322
      %v593 = vsel %vm338, %v577, %v325
      %v594 = vsel %vm338, %v578, %v330
      %v595 = vsel %vm338, %v579, %v333
      %v596 = vtanh.pop %v580
      %v597 = vtanh.pop %v581
      %v598 = vtanh.pop %v582
      %v599 = vtanh.pop %v583
      %v600 = vtanh.pop %v584
      %v601 = vtanh.pop %v585
      %v602 = vtanh.pop %v586
      %v603 = vtanh.pop %v587
      %v604 = vtanh.pop %v588
      %v605 = vtanh.pop %v589
      %v606 = vtanh.pop %v590
      %v607 = vtanh.pop %v591
      %v608 = vtanh.pop %v592
      %v609 = vtanh.pop %v593
      %v610 = vtanh.pop %v594
      %v611 = vtanh.pop %v595
      %612 = vst [vmem:[%s172] sm:$0xff] %v596
      %613 = vst [vmem:[%s172 + $0x8] sm:$0xff] %v597
      %614 = vst [vmem:[%s172 + $0x10] sm:$0xff] %v598
      %615 = vst [vmem:[%s172 + $0x18] sm:$0xff] %v599
      %616 = vst [vmem:[%s172 + $0x20] sm:$0xff] %v600
      %617 = vst [vmem:[%s172 + $0x28] sm:$0xff] %v601
      %618 = vst [vmem:[%s172 + $0x30] sm:$0xff] %v602
      %619 = vst [vmem:[%s172 + $0x38] sm:$0xff] %v603
      %620 = vst [vmem:[%s172 + $0x40] sm:$0xff] %v604
      %621 = vst [vmem:[%s172 + $0x48] sm:$0xff] %v605
      %622 = vst [vmem:[%s172 + $0x50] sm:$0xff] %v606
      %623 = vst [vmem:[%s172 + $0x58] sm:$0xff] %v607
      %624 = vst [vmem:[%s172 + $0x60] sm:$0xff] %v608
      %625 = vst [vmem:[%s172 + $0x68] sm:$0xff] %v609
      %626 = vst [vmem:[%s172 + $0x70] sm:$0xff] %v610
      %627 = vst [vmem:[%s172 + $0x78] sm:$0xff] %v611
      %s628 = smul.u32 16, %s14
      %p629 = scmp.lt.s32.totalorder %s628, 31
      %s630 = scalar_select %p629, %s628, 31
      %s631 = smul.addr %s630, 8
      %s632 = scalar_lea.vmem %s3, %s631
      // Predicated region
      $region33: #{actor_forward.1} parent=31 // pred_check
        %p633 = pneg %p100
      $region34: #{actor_forward.1} parent=31 // pred_check_branch
        %635 = sbr.rel (%p633) target = $region36
      $region35: #{actor_forward.1} parent=31 // pred_region
        %s636 = smul.u32 16, %s14
      $region36: #{actor_forward.1} parent=31 // pred_fallthru
        _
    $region32: #{actor_forward.1} parent=5 // pred_fallthru
      _
    %p637 = scmp.le.s32.totalorder 2, %s9
    // Predicated region
    $region37: #{actor_forward.1} parent=5 // pred_check
      %p638 = pneg %p637
    $region38: #{actor_forward.1} parent=5 // pred_check_branch
      %640 = sbr.rel (%p638) target = $region40
    $region39: #{actor_forward.1} parent=5 // pred_region
      %s641 = ssub.s32 %s9, 2
      // Predicated region
      $region41: #{actor_forward.1} parent=39 // pred_check
        %p642 = pneg %p106
      $region42: #{actor_forward.1} parent=39 // pred_check_branch
        %644 = sbr.rel (%p642) target = $region44
      $region43: #{actor_forward.1} parent=39 // pred_region
        %s645 = smul.u32 16, %s15
        %p646 = scmp.lt.s32.totalorder %s645, 31
        %s647 = scalar_select %p646, %s645, 31
        %s648 = smul.addr %s647, 8
        %s649 = scalar_lea.vmem %s3, %s648
      $region44: #{actor_forward.1} parent=39 // pred_fallthru
        _
    $region40: #{actor_forward.1} parent=5 // pred_fallthru
      _
  $region6: #{actor_forward.1} parent=0 // loop_footer
    %s13 = sadd.s32 1, %s9
  $region7: #{actor_forward.1} parent=0 // loop_footer_branch
    %8 = sbr.rel target = $region3
  $region8: #{actor_forward.1} parent=0 // loop_exit
    _

</llo_original>
